<compile_context>
chip_gen: v5e
topology: v5e:2x2
jax: 0.10.0
libtpu: 0.0.40
codegen_flags: <defaults>
</compile_context>

<pallas_src>
import math

import jax
import jax.numpy as jnp
from jax.experimental import pallas as pl
from jax.experimental.pallas import tpu as pltpu


def _round_up(a: int, b: int) -> int:
    return (a + b - 1) // b * b


def ffn_kernel(x_ref, w1_ref, b1_ref, w2_ref, b2_ref, o_ref, acc_ref):
    # x_ref:  (tm, Dp)   bf16 row tile of the input
    # w1_ref: (Dp, th)   bf16 first-linear weight slab (in, out) for this h tile
    # b1_ref: (1, th)    f32 bias slab
    # w2_ref: (th, Dp)   bf16 second-linear weight slab (in, out) for this h tile
    # b2_ref: (1, Dp)    f32 bias
    # o_ref:  (tm, Dp)   output row tile (resident across the h axis)
    # acc_ref:(tm, Dp)   f32 accumulator scratch
    hk = pl.program_id(1)
    nh = pl.num_programs(1)

    @pl.when(hk == 0)
    def _():
        # Fold the second bias into the accumulator init: saves a (tm, Dp) VPU
        # add and an extra accumulator read at finalize.
        acc_ref[...] = jnp.broadcast_to(b2_ref[...], acc_ref.shape)

    # First matmul (MXU, bf16 in / f32 out), bias + ReLU in f32.
    h = jnp.dot(x_ref[...], w1_ref[...], preferred_element_type=jnp.float32)
    h = jnp.maximum(h + b1_ref[...], 0.0)

    # Second matmul: partial sum over this hidden tile into the f32 accumulator.
    acc_ref[...] += jnp.dot(h.astype(w2_ref.dtype), w2_ref[...],
                            preferred_element_type=jnp.float32)

    @pl.when(hk == nh - 1)
    def _():
        # Dropout(p=0.2) -> identity (eval mode).
        o_ref[...] = acc_ref[...].astype(o_ref.dtype)


def _device_defaults():
    """Generation-aware (tm, th, vmem_capacity, two_tensorcores)."""
    kind = ""
    try:
        kind = jax.devices()[0].device_kind.lower()
    except Exception:  # pragma: no cover - CPU / interpret fallbacks
        pass
    if "v7" in kind:
        tm, th, cap, two_tc = 512, 512, 64 << 20, True
    elif "v6" in kind:
        tm, th, cap, two_tc = 1024, 1024, 128 << 20, False
    elif "v5" in kind:
        tm, th, cap, two_tc = 256, 512, 128 << 20, False
    else:
        tm, th, cap, two_tc = 256, 512, 64 << 20, False
    try:
        cap = int(pltpu.get_tpu_info().vmem_capacity_bytes)
    except Exception:
        pass
    return tm, th, cap, two_tc


def _vmem_budget(tm, th, d_pad, cbytes, obytes):
    """True VMEM working set for one grid step (double-buffered pipeline)."""
    return (
        2 * (tm * d_pad + d_pad * th + th * d_pad) * cbytes   # x, W1, W2 tiles
        + 2 * (th + d_pad) * 4                                 # b1, b2 (f32)
        + 2 * tm * d_pad * obytes                              # output tile
        + tm * d_pad * 4                                       # f32 accumulator
        + tm * th * (4 + cbytes)                               # h (f32) + bf16 cast
    )


def _pad_cast_2d(a, rows, cols, dtype):
    """Cast + zero-pad to (rows, cols); no-op when already aligned/typed."""
    if a.dtype != dtype:
        a = a.astype(dtype)
    r, c = a.shape
    if r == rows and c == cols:
        return a
    return jnp.pad(a, ((0, rows - r), (0, cols - c)))


def feed_forward(x, w1, b1, w2, b2, *, tm=None, th=None,
                 compute_dtype=jnp.bfloat16, out_dtype=None):
    """x: (B, T, D).  w1: (D, 4D), b1: (4D,), w2: (4D, D), b2: (D,).

    Returns (B, T, D) in `out_dtype` (default: x.dtype).  Matmuls run in
    `compute_dtype` on the MXU with f32 accumulation; bias adds / ReLU in f32.
    """
    B, T, D = x.shape
    H = w1.shape[1]
    M = B * T
    out_dtype = x.dtype if out_dtype is None else out_dtype

    cbytes = jnp.dtype(compute_dtype).itemsize
    obytes = jnp.dtype(out_dtype).itemsize

    tm_def, th_def, vmem_cap, two_tc = _device_defaults()
    tm_eff = tm if tm is not None else tm_def
    th_eff = th if th is not None else th_def

    # On a 2-TC chip make sure the "parallel" row axis has >= 2 tiles when M is
    # big enough to split without hurting MXU efficiency.
    if two_tc and M >= 512 and tm_eff >= M:
        tm_eff = _round_up((M + 1) // 2, 8)

    # Never larger than the (padded) problem; keep sublane/lane alignment.
    tm_eff = min(tm_eff, _round_up(M, 8))
    th_eff = min(th_eff, _round_up(H, 128))

    D_pad = _round_up(D, 128)

    # Fit the working set under the physical VMEM capacity with headroom for
    # compiler-internal scratch / MXU staging: shrink th first, then tm.
    headroom = 12 << 20
    while _vmem_budget(tm_eff, th_eff, D_pad, cbytes, obytes) > vmem_cap - headroom:
        if th_eff > 512:
            th_eff //= 2
        elif tm_eff > 256:
            tm_eff //= 2
        elif th_eff > 128:
            th_eff //= 2
        elif tm_eff > 8:
            tm_eff = max(8, tm_eff // 2)
        else:
            break

    M_pad = _round_up(M, tm_eff)
    H_pad = _round_up(H, th_eff)

    # Pad / cast inputs only when needed (callers may pre-cast weights once).
    x2 = _pad_cast_2d(x.reshape(M, D), M_pad, D_pad, compute_dtype)
    w1p = _pad_cast_2d(w1, D_pad, H_pad, compute_dtype)
    w2p = _pad_cast_2d(w2, H_pad, D_pad, compute_dtype)
    b1p = _pad_cast_2d(b1.reshape(1, H), 1, H_pad, jnp.float32)
    b2p = _pad_cast_2d(b2.reshape(1, D), 1, D_pad, jnp.float32)

    grid = (M_pad // tm_eff, H_pad // th_eff)
    n_row_tiles = grid[0]

    # Advisory cost hint: weights (and biases) are re-streamed once per row tile.
    cost = pl.CostEstimate(
        flops=4 * M_pad * D_pad * H_pad,              # two matmuls, 2*M*D*H each
        transcendentals=0,
        bytes_accessed=(
            M_pad * D_pad * cbytes                                   # x
            + n_row_tiles * (D_pad * H_pad + H_pad * D_pad) * cbytes  # W1, W2 re-streamed
            + n_row_tiles * (H_pad + D_pad) * 4                       # biases re-streamed
            + M_pad * D_pad * obytes                                  # out
        ),
    )

    vmem_budget = _vmem_budget(tm_eff, th_eff, D_pad, cbytes, obytes)
    vmem_limit = min(int(vmem_budget * 1.25) + (4 << 20), vmem_cap)

    out2 = pl.pallas_call(
        ffn_kernel,
        out_shape=jax.ShapeDtypeStruct((M_pad, D_pad), out_dtype),
        grid_spec=pltpu.PrefetchScalarGridSpec(
            num_scalar_prefetch=0,
            grid=grid,
            in_specs=[
                pl.BlockSpec((tm_eff, D_pad), lambda i, h: (i, 0)),   # x rows
                pl.BlockSpec((D_pad, th_eff), lambda i, h: (0, h)),   # W1 slab
                pl.BlockSpec((1, th_eff),     lambda i, h: (0, h)),   # b1 slab
                pl.BlockSpec((th_eff, D_pad), lambda i, h: (h, 0)),   # W2 slab
                pl.BlockSpec((1, D_pad),      lambda i, h: (0, 0)),   # b2
            ],
            out_specs=pl.BlockSpec((tm_eff, D_pad), lambda i, h: (i, 0)),
            scratch_shapes=[pltpu.VMEM((tm_eff, D_pad), jnp.float32)],
        ),
        compiler_params=pltpu.CompilerParams(
            dimension_semantics=("parallel", "arbitrary"),
            vmem_limit_bytes=vmem_limit,
        ),
        cost_estimate=cost,
    )(x2, w1p, b1p, w2p, b2p)

    return out2[:M, :D].reshape(B, T, D)


def init_params(key, embed_dim):
    """Deterministic init matching nn.Linear's default (uniform ±1/sqrt(fan_in)).

    Weights are returned already transposed to (in, out) layout.
    """
    hidden = 4 * embed_dim
    k1, k2, k3, k4 = jax.random.split(key, 4)
    bound1 = 1.0 / math.sqrt(embed_dim)
    bound2 = 1.0 / math.sqrt(hidden)
    w1 = jax.random.uniform(k1, (embed_dim, hidden), jnp.float32, -bound1, bound1)
    b1 = jax.random.uniform(k2, (hidden,), jnp.float32, -bound1, bound1)
    w2 = jax.random.uniform(k3, (hidden, embed_dim), jnp.float32, -bound2, bound2)
    b2 = jax.random.uniform(k4, (embed_dim,), jnp.float32, -bound2, bound2)
    return w1, b1, w2, b2


if __name__ == "__main__":
    B, T, D = 2, 8, 32          # batch=2, seq=8, embed_dim=32 -> hidden=128
    key = jax.random.PRNGKey(0)
    kx, kp = jax.random.split(key)

    x = jax.random.normal(kx, (B, T, D), jnp.float32)
    w1, b1, w2, b2 = init_params(kp, D)

    # Pre-cast the weights to the compute dtype once, outside the per-call path
    # (the wrapper skips the cast/pad when dtype & alignment already match).
    w1c = w1.astype(jnp.bfloat16)
    w2c = w2.astype(jnp.bfloat16)

    out = feed_forward(x, w1c, b1, w2c, b2)
    out = jax.block_until_ready(out)

    # Reference in plain JAX with the same bf16-input / f32-accumulate math
    # (eval-mode dropout == identity).
    xb = x.reshape(-1, D).astype(jnp.bfloat16)
    h_ref = jnp.maximum(
        jnp.dot(xb, w1.astype(jnp.bfloat16),
                preferred_element_type=jnp.float32) + b1, 0.0)
    ref = jnp.dot(h_ref.astype(jnp.bfloat16), w2.astype(jnp.bfloat16),
                  preferred_element_type=jnp.float32) + b2
    ref = ref.reshape(B, T, D).astype(x.dtype)

    assert out.shape == (B, T, D)
    assert jnp.allclose(out, ref, atol=2e-2, rtol=2e-2), "mismatch vs reference"

    print("KERNEL_OK")
</pallas_src>

<mosaic_0001>
module attributes {stable_mosaic.version = 11 : i64} {
  func.func @ffn_kernel(%arg0: i32, %arg1: i32, %arg2: memref<16x128xbf16, #tpu.memory_space<vmem>>, %arg3: memref<128x128xbf16, #tpu.memory_space<vmem>>, %arg4: memref<1x128xf32, #tpu.memory_space<vmem>>, %arg5: memref<128x128xbf16, #tpu.memory_space<vmem>>, %arg6: memref<1x128xf32, #tpu.memory_space<vmem>>, %arg7: memref<16x128xf32, #tpu.memory_space<vmem>>, %arg8: memref<16x128xf32, #tpu.memory_space<vmem>>) attributes {dimension_semantics = [#tpu.dimension_semantics<parallel>, #tpu.dimension_semantics<arbitrary>], iteration_bounds = array<i64: 1, 1>, scalar_prefetch = 0 : i64, scratch_operands = 1 : i64, tpu.core_type = #tpu.core_type<tc>, window_params = [{transform_indices = @transform_0, window_bounds = array<i64: 16, 128>}, {transform_indices = @transform_1, window_bounds = array<i64: 128, 128>}, {transform_indices = @transform_2, window_bounds = array<i64: 1, 128>}, {transform_indices = @transform_3, window_bounds = array<i64: 128, 128>}, {pipeline_mode = #tpu.pipeline_mode<synchronous>, transform_indices = @transform_4, window_bounds = array<i64: 1, 128>}, {transform_indices = @transform_5, window_bounds = array<i64: 16, 128>}]} {
    %c0_i32 = arith.constant 0 : i32
    %0 = arith.cmpi eq, %arg1, %c0_i32 : i32
    %1 = arith.extui %0 : i1 to i32
    %c0_i32_0 = arith.constant 0 : i32
    %2 = arith.cmpi ne, %1, %c0_i32_0 : i32
    scf.if %2 {
      %c0_16 = arith.constant 0 : index
      %c0_17 = arith.constant 0 : index
      %20 = vector.load %arg6[%c0_16, %c0_17] : memref<1x128xf32, #tpu.memory_space<vmem>>, vector<1x128xf32>
      %21 = vector.shape_cast %20 : vector<1x128xf32> to vector<1x128xf32>
      %22 = vector.broadcast %21 : vector<1x128xf32> to vector<16x128xf32>
      %c0_18 = arith.constant 0 : index
      %c0_19 = arith.constant 0 : index
      %23 = vector.load %arg8[%c0_18, %c0_19] : memref<16x128xf32, #tpu.memory_space<vmem>>, vector<16x128xf32>
      tpu.vector_store %arg8[%c0_18, %c0_19], %22 {strides = array<i32>} : memref<16x128xf32, #tpu.memory_space<vmem>>, vector<16x128xf32>,
    } else {
    }
    %c0 = arith.constant 0 : index
    %c0_1 = arith.constant 0 : index
    %3 = vector.load %arg2[%c0, %c0_1] : memref<16x128xbf16, #tpu.memory_space<vmem>>, vector<16x128xbf16>
    %c0_2 = arith.constant 0 : index
    %c0_3 = arith.constant 0 : index
    %4 = vector.load %arg3[%c0_2, %c0_3] : memref<128x128xbf16, #tpu.memory_space<vmem>>, vector<128x128xbf16>
    %cst = arith.constant dense<0.000000e+00> : vector<16x128xf32>
    %5 = tpu.matmul %3, %4, %cst {dimension_numbers = #tpu.dot_dimension_numbers<[1], [0], [0], [1], [0, 0, 1, 1], [], []>} : vector<16x128xbf16>, vector<128x128xbf16>, vector<16x128xf32> -> vector<16x128xf32>
    %c0_4 = arith.constant 0 : index
    %c0_5 = arith.constant 0 : index
    %6 = vector.load %arg4[%c0_4, %c0_5] : memref<1x128xf32, #tpu.memory_space<vmem>>, vector<1x128xf32>
    %7 = vector.broadcast %6 : vector<1x128xf32> to vector<16x128xf32>
    %8 = arith.addf %5, %7 : vector<16x128xf32>
    %cst_6 = arith.constant 0.000000e+00 : f32
    %9 = vector.broadcast %cst_6 : f32 to vector<16x128xf32>
    %10 = arith.maximumf %8, %9 : vector<16x128xf32>
    %c0_7 = arith.constant 0 : index
    %c0_8 = arith.constant 0 : index
    %11 = vector.load %arg8[%c0_7, %c0_8] : memref<16x128xf32, #tpu.memory_space<vmem>>, vector<16x128xf32>
    %12 = arith.truncf %10 : vector<16x128xf32> to vector<16x128xbf16>
    %c0_9 = arith.constant 0 : index
    %c0_10 = arith.constant 0 : index
    %13 = vector.load %arg5[%c0_9, %c0_10] : memref<128x128xbf16, #tpu.memory_space<vmem>>, vector<128x128xbf16>
    %cst_11 = arith.constant dense<0.000000e+00> : vector<16x128xf32>
    %14 = tpu.matmul %12, %13, %cst_11 {dimension_numbers = #tpu.dot_dimension_numbers<[1], [0], [0], [1], [0, 0, 1, 1], [], []>} : vector<16x128xbf16>, vector<128x128xbf16>, vector<16x128xf32> -> vector<16x128xf32>
    %15 = arith.addf %11, %14 : vector<16x128xf32>
    %c0_12 = arith.constant 0 : index
    %c0_13 = arith.constant 0 : index
    %16 = vector.load %arg8[%c0_12, %c0_13] : memref<16x128xf32, #tpu.memory_space<vmem>>, vector<16x128xf32>
    tpu.vector_store %arg8[%c0_12, %c0_13], %15 {strides = array<i32>} : memref<16x128xf32, #tpu.memory_space<vmem>>, vector<16x128xf32>,
    %c0_i32_14 = arith.constant 0 : i32
    %17 = arith.cmpi eq, %arg1, %c0_i32_14 : i32
    %18 = arith.extui %17 : i1 to i32
    %c0_i32_15 = arith.constant 0 : i32
    %19 = arith.cmpi ne, %18, %c0_i32_15 : i32
    scf.if %19 {
      %c0_16 = arith.constant 0 : index
      %c0_17 = arith.constant 0 : index
      %20 = vector.load %arg8[%c0_16, %c0_17] : memref<16x128xf32, #tpu.memory_space<vmem>>, vector<16x128xf32>
      %c0_18 = arith.constant 0 : index
      %c0_19 = arith.constant 0 : index
      %21 = vector.load %arg7[%c0_18, %c0_19] : memref<16x128xf32, #tpu.memory_space<vmem>>, vector<16x128xf32>
      tpu.vector_store %arg7[%c0_18, %c0_19], %20 {strides = array<i32>} : memref<16x128xf32, #tpu.memory_space<vmem>>, vector<16x128xf32>,
    } else {
    }
    return
  }
  func.func @transform_0(%arg0: i32, %arg1: i32) -> (i32, i32) {
    %c0_i32 = arith.constant 0 : i32
    %c0_i32_0 = arith.constant 0 : i32
    return %arg0, %c0_i32 : i32, i32
  }
  func.func @transform_1(%arg0: i32, %arg1: i32) -> (i32, i32) {
    %c0_i32 = arith.constant 0 : i32
    %c0_i32_0 = arith.constant 0 : i32
    return %c0_i32, %arg1 : i32, i32
  }
  func.func @transform_2(%arg0: i32, %arg1: i32) -> (i32, i32) {
    %c0_i32 = arith.constant 0 : i32
    %c0_i32_0 = arith.constant 0 : i32
    return %c0_i32, %arg1 : i32, i32
  }
  func.func @transform_3(%arg0: i32, %arg1: i32) -> (i32, i32) {
    %c0_i32 = arith.constant 0 : i32
    %c0_i32_0 = arith.constant 0 : i32
    return %arg1, %c0_i32 : i32, i32
  }
  func.func @transform_4(%arg0: i32, %arg1: i32) -> (i32, i32) {
    %c0_i32 = arith.constant 0 : i32
    %c0_i32_0 = arith.constant 0 : i32
    %c0_i32_1 = arith.constant 0 : i32
    return %c0_i32, %c0_i32_0 : i32, i32
  }
  func.func @transform_5(%arg0: i32, %arg1: i32) -> (i32, i32) {
    %c0_i32 = arith.constant 0 : i32
    %c0_i32_0 = arith.constant 0 : i32
    return %arg0, %c0_i32 : i32, i32
  }
}

</mosaic_0001>

<llo_original>
// kernel: tpu_custom_call.1
$region0: #{tpu_custom_call.1}
  #allocation0 [shape = 'u32[]', space=smem, size = 0x4, offset = 0x4, fixed_abs, tag = 'smem constant byte address 0x4 - core index']
  #allocation1 [shape = 'u32[72,128]{1,0:T(1,128)}', space=vmem, size = 0x9000, scoped, tag = 'internal scratch']
  #allocation2 [shape = 'f32[16,128]{1,0:T(8,128)}', space=vmem, size = 0x2000, scoped, tag = 'scratch operand']
  %s0 = inlined_call_operand.hbm [shape: bf16[16,128], index: 0, kind: input, shape index: {}]
  %s1 = inlined_call_operand.hbm [shape: bf16[128,128], index: 1, kind: input, shape index: {}]
  %s2 = inlined_call_operand.vmem [shape: f32[1,128], index: 2, kind: input, shape index: {}]
  %s3 = inlined_call_operand.hbm [shape: bf16[128,128], index: 3, kind: input, shape index: {}]
  %s4 = inlined_call_operand.vmem [shape: f32[1,128], index: 4, kind: input, shape index: {}]
  %s5 = inlined_call_operand.hbm [shape: f32[16,128], index: 5, kind: output, shape index: {}]
  %s6 = sld [smem:[#allocation0]]
  $region50: #{tpu_custom_call.1} parent=0
    _
  %s8 = ssub.s32 1, %s6
  %s9 = scalar_select 0, %s8, %s6
  $region1: #{tpu_custom_call.1} parent=0
    #allocation3 [shape = 'u8[4096]{0}', space=vmem, size = 0x1000, scoped, tag = 'input window, operand 0, single buffered']
    #allocation4 [shape = 's32[1]{0}', space=sflag, size = 0x4, scoped, tag = 'scoped memory for tpu_custom_call.1']
    #allocation5 [shape = 's32[1]{0}', space=sflag, size = 0x4, scoped, tag = 'scoped memory for tpu_custom_call.1']
    #allocation6 [shape = 'u8[32768]{0}', space=vmem, size = 0x8000, scoped, tag = 'input window, operand 1, single buffered']
    #allocation7 [shape = 's32[1]{0}', space=sflag, size = 0x4, scoped, tag = 'scoped memory for tpu_custom_call.1']
    #allocation8 [shape = 'u8[32768]{0}', space=vmem, size = 0x8000, scoped, tag = 'input window, operand 3, single buffered']
    #allocation9 [shape = 'u8[8192]{0}', space=vmem, size = 0x2000, scoped, tag = 'output window, operand 0, single buffered']
    %10 = vsyncpa [#allocation4], 0
    %11 = vsyncpa [#allocation7], 0
    %12 = vsyncpa [#allocation5], 0
    // Predicated region
    $region2: #{tpu_custom_call.1} parent=1 // pred_check
      _
    $region3: #{tpu_custom_call.1} parent=1 // pred_check_branch
      %14 = sbr.rel (0) target = $region5
    $region4: #{tpu_custom_call.1} parent=1 // pred_region
      %16 = vsyncadd [#allocation4], 0
      %s17 = sshll.u32 %s0, 4
      %s18 = int_to_ptr.hbm [resolvable:$true] %s17
      %s19 = sshll.u32 [#allocation3], 4
      %s20 = int_to_ptr.vmem [resolvable:$true] %s19
      %25 = dma.hbm_to_vmem [thread:$0]  %s18, 128, %s20, [#allocation4], 64, 64, 4
    $region5: #{tpu_custom_call.1} parent=1 // pred_fallthru
      _
    // Predicated region
    $region6: #{tpu_custom_call.1} parent=1 // pred_check
      _
    $region7: #{tpu_custom_call.1} parent=1 // pred_check_branch
      %27 = sbr.rel (0) target = $region9
    $region8: #{tpu_custom_call.1} parent=1 // pred_region
      %29 = vsyncadd [#allocation7], 0
      %s30 = sshll.u32 %s1, 4
      %s31 = int_to_ptr.hbm [resolvable:$true] %s30
      %s32 = sshll.u32 [#allocation6], 4
      %s33 = int_to_ptr.vmem [resolvable:$true] %s32
      %38 = dma.hbm_to_vmem [thread:$0]  %s31, 1024, %s33, [#allocation7], 64, 64, 4
    $region9: #{tpu_custom_call.1} parent=1 // pred_fallthru
      _
    // Predicated region
    $region10: #{tpu_custom_call.1} parent=1 // pred_check
      _
    $region11: #{tpu_custom_call.1} parent=1 // pred_check_branch
      %40 = sbr.rel (0) target = $region13
    $region12: #{tpu_custom_call.1} parent=1 // pred_region
      _
    $region13: #{tpu_custom_call.1} parent=1 // pred_fallthru
      _
    // Predicated region
    $region14: #{tpu_custom_call.1} parent=1 // pred_check
      _
    $region15: #{tpu_custom_call.1} parent=1 // pred_check_branch
      %42 = sbr.rel (0) target = $region17
    $region16: #{tpu_custom_call.1} parent=1 // pred_region
      %44 = vsyncadd [#allocation7], 0
      %s45 = sshll.u32 %s3, 4
      %s46 = int_to_ptr.hbm [resolvable:$true] %s45
      %s47 = sshll.u32 [#allocation8], 4
      %s48 = int_to_ptr.vmem [resolvable:$true] %s47
      %53 = dma.hbm_to_vmem [thread:$0]  %s46, 1024, %s48, [#allocation7], 64, 64, 4
    $region17: #{tpu_custom_call.1} parent=1 // pred_fallthru
      _
    // Predicated region
    $region18: #{tpu_custom_call.1} parent=1 // pred_check
      _
    $region19: #{tpu_custom_call.1} parent=1 // pred_check_branch
      %55 = sbr.rel (0) target = $region21
    $region20: #{tpu_custom_call.1} parent=1 // pred_region
      _
    $region21: #{tpu_custom_call.1} parent=1 // pred_fallthru
      _
    // Predicated region
    $region22: #{tpu_custom_call.1} parent=1 // pred_check
      _
    $region23: #{tpu_custom_call.1} parent=1 // pred_check_branch
      %57 = sbr.rel (0) target = $region25
    $region24: #{tpu_custom_call.1} parent=1 // pred_region
      %59 = dma.done [#allocation4], 128
    $region25: #{tpu_custom_call.1} parent=1 // pred_fallthru
      _
    // Predicated region
    $region26: #{tpu_custom_call.1} parent=1 // pred_check
      _
    $region27: #{tpu_custom_call.1} parent=1 // pred_check_branch
      %61 = sbr.rel (0) target = $region29
    $region28: #{tpu_custom_call.1} parent=1 // pred_region
      %63 = dma.done [#allocation7], 1024
    $region29: #{tpu_custom_call.1} parent=1 // pred_fallthru
      _
    // Predicated region
    $region30: #{tpu_custom_call.1} parent=1 // pred_check
      _
    $region31: #{tpu_custom_call.1} parent=1 // pred_check_branch
      %65 = sbr.rel (0) target = $region33
    $region32: #{tpu_custom_call.1} parent=1 // pred_region
      %67 = dma.done [#allocation7], 1024
    $region33: #{tpu_custom_call.1} parent=1 // pred_fallthru
      _
    %p68 = scmp.eq.s32.totalorder 0, 0
    // Predicated region
    $region34: #{tpu_custom_call.1} parent=1 // pred_check
      %p69 = pneg %p68
    $region35: #{tpu_custom_call.1} parent=1 // pred_check_branch
      %71 = sbr.rel (%p69) target = $region37
    $region36: #{tpu_custom_call.1} parent=1 // pred_region
      %v72 = vld [vmem:[%s4] sm:$0x1]
      %v74 = vperm.slane %v72, 0
      %76 = vst [vmem:[#allocation2] sm:$0xff] %v74
      %77 = vst [vmem:[#allocation2 + $0x8] sm:$0xff] %v74
    $region37: #{tpu_custom_call.1} parent=1 // pred_fallthru
      _
    %v78 = vld [vmem:[#allocation3] sm:$0xf]
    %v79 = vld [vmem:[#allocation3 + $0x4] sm:$0xf]
    %v80 = vld [vmem:[#allocation6] sm:$0xf]
    %v81 = vld [vmem:[#allocation6 + $0x4] sm:$0xf]
    %v82 = vld [vmem:[#allocation6 + $0x8] sm:$0xf]
    %v83 = vld [vmem:[#allocation6 + $0xc] sm:$0xf]
    %v84 = vld [vmem:[#allocation6 + $0x10] sm:$0xf]
    %v85 = vld [vmem:[#allocation6 + $0x14] sm:$0xf]
    %v86 = vld [vmem:[#allocation6 + $0x18] sm:$0xf]
    %v87 = vld [vmem:[#allocation6 + $0x1c] sm:$0xf]
    %v88 = vld [vmem:[#allocation6 + $0x20] sm:$0xf]
    %v89 = vld [vmem:[#allocation6 + $0x24] sm:$0xf]
    %v90 = vld [vmem:[#allocation6 + $0x28] sm:$0xf]
    %v91 = vld [vmem:[#allocation6 + $0x2c] sm:$0xf]
    %v92 = vld [vmem:[#allocation6 + $0x30] sm:$0xf]
    %v93 = vld [vmem:[#allocation6 + $0x34] sm:$0xf]
    %v94 = vld [vmem:[#allocation6 + $0x38] sm:$0xf]
    %v95 = vld [vmem:[#allocation6 + $0x3c] sm:$0xf]
    %v96 = vld [vmem:[%s2] sm:$0x1]
    %v98 = vperm.slane %v96, 0
    %v102 = vunpack.c.l.b16 %v78
    %v103 = vunpack.c.l.b16 %v79
    %v104 = vpack.c.b16 %v103, %v102
    %v122 = vunpack.c.l.b16 %v80
    %v123 = vunpack.c.l.b16 %v81
    %v124 = vunpack.c.l.b16 %v82
    %v125 = vunpack.c.l.b16 %v83
    %v126 = vunpack.c.l.b16 %v84
    %v127 = vunpack.c.l.b16 %v85
    %v128 = vunpack.c.l.b16 %v86
    %v129 = vunpack.c.l.b16 %v87
    %v130 = vunpack.c.l.b16 %v88
    %v131 = vunpack.c.l.b16 %v89
    %v132 = vunpack.c.l.b16 %v90
    %v133 = vunpack.c.l.b16 %v91
    %v134 = vunpack.c.l.b16 %v92
    %v135 = vunpack.c.l.b16 %v93
    %v136 = vunpack.c.l.b16 %v94
    %v137 = vunpack.c.l.b16 %v95
    %v138 = vpack.c.b16 %v123, %v122
    %v139 = vpack.c.b16 %v125, %v124
    %v140 = vpack.c.b16 %v127, %v126
    %v141 = vpack.c.b16 %v129, %v128
    %v142 = vpack.c.b16 %v131, %v130
    %v143 = vpack.c.b16 %v133, %v132
    %v144 = vpack.c.b16 %v135, %v134
    %v145 = vpack.c.b16 %v137, %v136
    %154 = vmatpush.bf16.msra.mxu0 %v145
    %155 = vmatpush.bf16.msra.mxu0 %v144
    %156 = vmatpush.bf16.msra.mxu0 %v143
    %157 = vmatpush.bf16.msra.mxu0 %v142
    %158 = vmatpush.bf16.msra.mxu0 %v141
    %159 = vmatpush.bf16.msra.mxu0 %v140
    %160 = vmatpush.bf16.msra.mxu0 %v139
    %161 = vmatpush.bf16.msra.mxu0 %v138
    %162 = vmatmul.bf16.gmra.mxu0 %v104
    %v163 = vpop.f32.mrf.mxu0
    %v164 = vadd.f32 %v98, %v163
    %v165 = vpop.f32.mrf.mxu0
    %v166 = vadd.f32 %v98, %v165
    %167 = vdwg.mxu0
    %v168 = vmax.f32 %v164, 0.0
    %v169 = vmax.f32 %v166, 0.0
    %v170 = vld [vmem:[#allocation2] sm:$0xff]
    %v171 = vld [vmem:[#allocation2 + $0x8] sm:$0xff]
    %v172 = vpack.c.bf16 %v169, %v168
    %v173 = vld [vmem:[#allocation8] sm:$0xf]
    %v174 = vld [vmem:[#allocation8 + $0x4] sm:$0xf]
    %v175 = vld [vmem:[#allocation8 + $0x8] sm:$0xf]
    %v176 = vld [vmem:[#allocation8 + $0xc] sm:$0xf]
    %v177 = vld [vmem:[#allocation8 + $0x10] sm:$0xf]
    %v178 = vld [vmem:[#allocation8 + $0x14] sm:$0xf]
    %v179 = vld [vmem:[#allocation8 + $0x18] sm:$0xf]
    %v180 = vld [vmem:[#allocation8 + $0x1c] sm:$0xf]
    %v181 = vld [vmem:[#allocation8 + $0x20] sm:$0xf]
    %v182 = vld [vmem:[#allocation8 + $0x24] sm:$0xf]
    %v183 = vld [vmem:[#allocation8 + $0x28] sm:$0xf]
    %v184 = vld [vmem:[#allocation8 + $0x2c] sm:$0xf]
    %v185 = vld [vmem:[#allocation8 + $0x30] sm:$0xf]
    %v186 = vld [vmem:[#allocation8 + $0x34] sm:$0xf]
    %v187 = vld [vmem:[#allocation8 + $0x38] sm:$0xf]
    %v188 = vld [vmem:[#allocation8 + $0x3c] sm:$0xf]
    %v205 = vunpack.c.l.b16 %v173
    %v206 = vunpack.c.l.b16 %v174
    %v207 = vunpack.c.l.b16 %v175
    %v208 = vunpack.c.l.b16 %v176
    %v209 = vunpack.c.l.b16 %v177
    %v210 = vunpack.c.l.b16 %v178
    %v211 = vunpack.c.l.b16 %v179
    %v212 = vunpack.c.l.b16 %v180
    %v213 = vunpack.c.l.b16 %v181
    %v214 = vunpack.c.l.b16 %v182
    %v215 = vunpack.c.l.b16 %v183
    %v216 = vunpack.c.l.b16 %v184
    %v217 = vunpack.c.l.b16 %v185
    %v218 = vunpack.c.l.b16 %v186
    %v219 = vunpack.c.l.b16 %v187
    %v220 = vunpack.c.l.b16 %v188
    %v221 = vpack.c.b16 %v206, %v205
    %v222 = vpack.c.b16 %v208, %v207
    %v223 = vpack.c.b16 %v210, %v209
    %v224 = vpack.c.b16 %v212, %v211
    %v225 = vpack.c.b16 %v214, %v213
    %v226 = vpack.c.b16 %v216, %v215
    %v227 = vpack.c.b16 %v218, %v217
    %v228 = vpack.c.b16 %v220, %v219
    %237 = vmatpush.bf16.msra.mxu0 %v228
    %238 = vmatpush.bf16.msra.mxu0 %v227
    %239 = vmatpush.bf16.msra.mxu0 %v226
    %240 = vmatpush.bf16.msra.mxu0 %v225
    %241 = vmatpush.bf16.msra.mxu0 %v224
    %242 = vmatpush.bf16.msra.mxu0 %v223
    %243 = vmatpush.bf16.msra.mxu0 %v222
    %244 = vmatpush.bf16.msra.mxu0 %v221
    %245 = vmatmul.bf16.gmra.mxu0 %v172
    %v246 = vpop.f32.mrf.mxu0
    %v247 = vadd.f32 0.0, %v246
    %v248 = vpop.f32.mrf.mxu0
    %v249 = vadd.f32 0.0, %v248
    %250 = vdwg.mxu0
    %v251 = vadd.f32 %v170, %v247
    %v252 = vadd.f32 %v171, %v249
    %253 = vst [vmem:[#allocation2] sm:$0xff] %v251
    %254 = vst [vmem:[#allocation2 + $0x8] sm:$0xff] %v252
    // Predicated region
    $region38: #{tpu_custom_call.1} parent=1 // pred_check
      %p255 = pneg %p68
    $region39: #{tpu_custom_call.1} parent=1 // pred_check_branch
      %257 = sbr.rel (%p255) target = $region41
    $region40: #{tpu_custom_call.1} parent=1 // pred_region
      %v258 = vld [vmem:[#allocation2] sm:$0xff]
      %v259 = vld [vmem:[#allocation2 + $0x8] sm:$0xff]
      %260 = vst [vmem:[#allocation9] sm:$0xff] %v258
      %261 = vst [vmem:[#allocation9 + $0x8] sm:$0xff] %v259
    $region41: #{tpu_custom_call.1} parent=1 // pred_fallthru
      _
    // Predicated region
    $region42: #{tpu_custom_call.1} parent=1 // pred_check
      _
    $region43: #{tpu_custom_call.1} parent=1 // pred_check_branch
      %263 = sbr.rel (0) target = $region45
    $region44: #{tpu_custom_call.1} parent=1 // pred_region
      %265 = vsyncadd [#allocation5], 0
      %s266 = sshll.u32 [#allocation9], 4
      %s267 = int_to_ptr.vmem [resolvable:$true] %s266
      %s268 = sshll.u32 %s5, 4
      %s269 = int_to_ptr.hbm [resolvable:$true] %s268
      %274 = dma.vmem_to_hbm [thread:$0]  %s267, 256, %s269, [#allocation5], 128, 128, 8
    $region45: #{tpu_custom_call.1} parent=1 // pred_fallthru
      _
    // Predicated region
    $region46: #{tpu_custom_call.1} parent=1 // pred_check
      _
    $region47: #{tpu_custom_call.1} parent=1 // pred_check_branch
      %276 = sbr.rel (0) target = $region49
    $region48: #{tpu_custom_call.1} parent=1 // pred_region
      %278 = dma.done [#allocation5], 256
    $region49: #{tpu_custom_call.1} parent=1 // pred_fallthru
      _
    %279 = vsyncpa [#allocation4], 1
    %280 = vsyncpa [#allocation7], 1
    %281 = vsyncpa [#allocation5], 1

</llo_original>
